<compile_context>
chip_gen: v6e
topology: v6e:2x2x1
jax: 0.10.0
libtpu: 0.0.40
codegen_flags: <defaults>
</compile_context>

<pallas_src>
import functools
import math

import jax
import jax.numpy as jnp
from jax.experimental import pallas as pl
from jax.experimental.pallas import tpu as pltpu


def _round_up(x, m):
    return (x + m - 1) // m * m


# ----------------------------------------------------------------------------
# Fast path: table resident in VMEM, gather via one-hot MXU matmul.
# ----------------------------------------------------------------------------
def _embed_onehot_kernel(ids_ref, table_ref, o_ref, *, scale):
    # ids_ref  : (tile, 1) int32 VMEM block
    # table_ref: (vocab, d_model) full VMEM block (resident across grid steps)
    # o_ref    : (tile, d_model) VMEM output block
    ids = ids_ref[...]                                    # (tile, 1)
    tile = ids.shape[0]
    vocab = table_ref.shape[0]
    cols = jax.lax.broadcasted_iota(jnp.int32, (tile, vocab), 1)
    one_hot = (cols == ids).astype(table_ref.dtype)       # exact 0/1 rows
    acc = jnp.dot(one_hot, table_ref[...],
                  preferred_element_type=jnp.float32)
    o_ref[...] = (acc * scale).astype(o_ref.dtype)


# ----------------------------------------------------------------------------
# Large-table path: HBM table, software-pipelined per-row DMA gather into the
# output block, scale overlapped with the gather.
# ----------------------------------------------------------------------------
def _embed_gather_hbm_kernel(ids_ref, table_ref, o_ref, sems, *,
                             tile_rows, num_slots, scale):
    # ids_ref  : (rows_padded,) int32 in SMEM (scalar-prefetched)
    # table_ref: (vocab, d_model) in HBM (pl.ANY)
    # o_ref    : (tile_rows, d_model) VMEM output block (DMA destination)
    # sems     : (num_slots,) DMA semaphores
    base = pl.program_id(0) * tile_rows
    dtype = o_ref.dtype
    scale_c = jnp.asarray(scale, dtype)

    def start(r, tok):
        pltpu.make_async_copy(
            table_ref.at[pl.ds(tok, 1), :],
            o_ref.at[pl.ds(r, 1), :],
            sems.at[r % num_slots],
        ).start()

    def wait(r, tok):
        # Rebuild with the *same* src slice so the descriptor matches start().
        pltpu.make_async_copy(
            table_ref.at[pl.ds(tok, 1), :],
            o_ref.at[pl.ds(r, 1), :],
            sems.at[r % num_slots],
        ).wait()

    prime = min(num_slots, tile_rows)

    # --- Prime: issue the first `prime` row copies. ---
    def prime_body(r, carry):
        tok = ids_ref[base + r]
        start(r, tok)
        return carry

    jax.lax.fori_loop(0, prime, prime_body, 0, unroll=True)

    # --- Steady state: keep `num_slots` DMAs in flight; scale completed
    #     8-row groups in place while later rows are still being gathered. ---
    def steady_body(r, carry):
        c = r - num_slots
        # Hoist both SMEM id reads above the wait (wait breaks sst->sld fwd).
        tok_new = ids_ref[base + r]
        tok_done = ids_ref[base + c]
        wait(c, tok_done)
        start(r, tok_new)

        @pl.when((c % 8) == 7)
        def _():
            g = pl.multiple_of(c - 7, 8)
            grp = o_ref[pl.ds(g, 8), :]
            o_ref[pl.ds(g, 8), :] = (grp * scale_c).astype(dtype)

        return carry

    jax.lax.fori_loop(prime, tile_rows, steady_body, 0, unroll=8)

    # --- Drain the remaining in-flight copies. ---
    def drain_body(r, carry):
        tok = ids_ref[base + r]
        wait(r, tok)
        return carry

    jax.lax.fori_loop(tile_rows - prime, tile_rows, drain_body, 0, unroll=True)

    # --- Scale the tail rows not covered by the in-loop group scale. ---
    tail_start = tile_rows - prime          # static; == 0 when tile <= slots
    tail_len = tile_rows - tail_start
    tail = o_ref[pl.ds(tail_start, tail_len), :]
    o_ref[pl.ds(tail_start, tail_len), :] = (tail * scale_c).astype(dtype)


# ----------------------------------------------------------------------------
# Wrapper
# ----------------------------------------------------------------------------
def input_embedding(token_ids, embedding_table, *, tile_rows=256, num_slots=16,
                    fast_path_vmem_bytes=12 * 1024 * 1024):
    """token_ids: int array of any shape; embedding_table: (vocab, d_model)."""
    vocab, d_model = embedding_table.shape
    orig_shape = token_ids.shape
    rows = int(math.prod(orig_shape)) if orig_shape else 1
    if rows == 0:
        return jnp.zeros((*orig_shape, d_model), embedding_table.dtype)

    itemsize = jnp.dtype(embedding_table.dtype).itemsize
    scale = float(math.sqrt(d_model))

    # Tile size: sublane-aligned, capped so two output buffers stay ~<= 8 MiB
    # (fits the v5e 16 MiB / v7x 32 MiB default scoped VMEM comfortably).
    max_tile = max(8, ((8 * 1024 * 1024) // (2 * d_model * itemsize)) // 8 * 8)
    eff_tile = min(tile_rows, max_tile, _round_up(rows, 8))
    eff_tile = max(8, (eff_tile // 8) * 8)

    num_tiles = pl.cdiv(rows, eff_tile)
    rows_padded = num_tiles * eff_tile

    ids_flat = token_ids.reshape(rows).astype(jnp.int32)
    if rows_padded != rows:
        ids_flat = jnp.pad(ids_flat, (0, rows_padded - rows))

    out_shape = jax.ShapeDtypeStruct((rows, d_model), embedding_table.dtype)
    out_block = eff_tile * d_model * itemsize
    table_bytes = vocab * d_model * itemsize

    # Conservative VMEM need of the fast path (table counted twice in case the
    # resident block is still double-buffered, + one-hot / iota intermediates).
    fast_need = (2 * table_bytes + 2 * out_block + 2 * eff_tile * 4
                 + eff_tile * vocab * (4 + itemsize) + eff_tile * d_model * 4)

    if fast_need <= fast_path_vmem_bytes:
        # ---------------- VMEM-resident table: one-hot MXU gather ----------
        ids_2d = ids_flat.reshape(rows_padded, 1)
        cost = pl.CostEstimate(
            flops=2 * rows_padded * vocab * d_model + rows_padded * d_model,
            transcendentals=0,
            bytes_accessed=table_bytes + rows_padded * 4
            + rows * d_model * itemsize)
        out = pl.pallas_call(
            functools.partial(_embed_onehot_kernel, scale=scale),
            out_shape=out_shape,
            grid=(num_tiles,),
            in_specs=[
                pl.BlockSpec((eff_tile, 1), lambda i: (i, 0)),
                pl.BlockSpec((vocab, d_model), lambda i: (0, 0)),  # resident
            ],
            out_specs=pl.BlockSpec((eff_tile, d_model), lambda i: (i, 0)),
            compiler_params=pltpu.CompilerParams(
                dimension_semantics=("parallel",)),
            cost_estimate=cost,
        )(ids_2d, embedding_table)
    else:
        # ---------------- HBM table: pipelined per-row DMA gather ----------
        slots = min(num_slots, eff_tile)
        slots = max(8, (slots // 8) * 8)
        kernel = functools.partial(
            _embed_gather_hbm_kernel, tile_rows=eff_tile, num_slots=slots,
            scale=scale)
        cost = pl.CostEstimate(
            flops=rows_padded * d_model,
            transcendentals=0,
            bytes_accessed=rows_padded * 4
            + 2 * rows_padded * d_model * itemsize)
        out = pl.pallas_call(
            kernel,
            out_shape=out_shape,
            grid_spec=pltpu.PrefetchScalarGridSpec(
                num_scalar_prefetch=1,
                grid=(num_tiles,),
                in_specs=[pl.BlockSpec(memory_space=pl.ANY)],  # table in HBM
                out_specs=pl.BlockSpec((eff_tile, d_model),
                                       lambda i, ids: (i, 0)),
                scratch_shapes=[pltpu.SemaphoreType.DMA((slots,))]),
            compiler_params=pltpu.CompilerParams(
                dimension_semantics=("parallel",)),
            cost_estimate=cost,
        )(ids_flat, embedding_table)

    return out.reshape(*orig_shape, d_model)


if __name__ == "__main__":
    d_model, vocab_size = 128, 512
    scale = math.sqrt(d_model)

    key = jax.random.PRNGKey(0)
    k_ids, k_tab = jax.random.split(key)
    # nn.Embedding default init: N(0, 1).
    table = jax.random.normal(k_tab, (vocab_size, d_model), jnp.float32)

    # Case 1: small table -> VMEM-resident one-hot MXU fast path.
    batch, seq = 2, 8
    token_ids = jax.random.randint(k_ids, (batch, seq), 0, vocab_size,
                                   dtype=jnp.int32)
    out = jax.block_until_ready(input_embedding(token_ids, table))
    ref = jnp.take(table, token_ids, axis=0) * scale
    assert out.shape == (batch, seq, d_model)
    assert jnp.allclose(out, ref, atol=1e-4, rtol=1e-5), "fast path mismatch"

    # Case 2: force the HBM per-row DMA gather path (exercises the pipelined
    # prime/steady/drain loops and the overlapped scaling).
    batch2, seq2 = 2, 64
    token_ids2 = jax.random.randint(jax.random.PRNGKey(1), (batch2, seq2), 0,
                                    vocab_size, dtype=jnp.int32)
    out2 = jax.block_until_ready(
        input_embedding(token_ids2, table, fast_path_vmem_bytes=0))
    ref2 = jnp.take(table, token_ids2, axis=0) * scale
    assert out2.shape == (batch2, seq2, d_model)
    assert jnp.allclose(out2, ref2, atol=1e-5, rtol=1e-5), "gather path mismatch"

    print("KERNEL_OK")
</pallas_src>

<mosaic_0001>
module attributes {stable_mosaic.version = 11 : i64} {
  func.func @_embed_onehot_kernel(%arg0: i32, %arg1: memref<16x1xi32, #tpu.memory_space<vmem>>, %arg2: memref<512x128xf32, #tpu.memory_space<vmem>>, %arg3: memref<16x128xf32, #tpu.memory_space<vmem>>) attributes {dimension_semantics = [#tpu.dimension_semantics<parallel>], iteration_bounds = array<i64: 1>, scalar_prefetch = 0 : i64, scratch_operands = 0 : i64, tpu.core_type = #tpu.core_type<tc>, window_params = [{transform_indices = @transform_0, window_bounds = array<i64: 16, 1>}, {pipeline_mode = #tpu.pipeline_mode<synchronous>, transform_indices = @transform_1, window_bounds = array<i64: 512, 128>}, {transform_indices = @transform_2, window_bounds = array<i64: 16, 128>}]} {
    %c0 = arith.constant 0 : index
    %c0_0 = arith.constant 0 : index
    %0 = vector.load %arg1[%c0, %c0_0] : memref<16x1xi32, #tpu.memory_space<vmem>>, vector<16x1xi32>
    %1 = tpu.iota {dimensions = array<i32: 1>} : vector<16x512xi32>
    %2 = vector.broadcast %0 : vector<16x1xi32> to vector<16x512xi32>
    %3 = arith.cmpi eq, %1, %2 : vector<16x512xi32>
    %4 = arith.extui %3 : vector<16x512xi1> to vector<16x512xi32>
    %5 = arith.sitofp %4 : vector<16x512xi32> to vector<16x512xf32>
    %c0_1 = arith.constant 0 : index
    %c0_2 = arith.constant 0 : index
    %6 = vector.load %arg2[%c0_1, %c0_2] : memref<512x128xf32, #tpu.memory_space<vmem>>, vector<512x128xf32>
    %cst = arith.constant dense<0.000000e+00> : vector<16x128xf32>
    %7 = tpu.matmul %5, %6, %cst {dimension_numbers = #tpu.dot_dimension_numbers<[1], [0], [0], [1], [0, 0, 1, 1], [], []>} : vector<16x512xf32>, vector<512x128xf32>, vector<16x128xf32> -> vector<16x128xf32>
    %cst_3 = arith.constant 11.3137083 : f32
    %8 = vector.broadcast %cst_3 : f32 to vector<16x128xf32>
    %9 = arith.mulf %7, %8 : vector<16x128xf32>
    %c0_4 = arith.constant 0 : index
    %c0_5 = arith.constant 0 : index
    %10 = vector.load %arg3[%c0_4, %c0_5] : memref<16x128xf32, #tpu.memory_space<vmem>>, vector<16x128xf32>
    tpu.vector_store %arg3[%c0_4, %c0_5], %9 {strides = array<i32>} : memref<16x128xf32, #tpu.memory_space<vmem>>, vector<16x128xf32>,
    return
  }
  func.func @transform_0(%arg0: i32) -> (i32, i32) {
    %c0_i32 = arith.constant 0 : i32
    %c0_i32_0 = arith.constant 0 : i32
    return %arg0, %c0_i32 : i32, i32
  }
  func.func @transform_1(%arg0: i32) -> (i32, i32) {
    %c0_i32 = arith.constant 0 : i32
    %c0_i32_0 = arith.constant 0 : i32
    %c0_i32_1 = arith.constant 0 : i32
    return %c0_i32, %c0_i32_0 : i32, i32
  }
  func.func @transform_2(%arg0: i32) -> (i32, i32) {
    %c0_i32 = arith.constant 0 : i32
    %c0_i32_0 = arith.constant 0 : i32
    return %arg0, %c0_i32 : i32, i32
  }
}

</mosaic_0001>

<llo_original>
// kernel: tpu_custom_call.1
$region0: #{tpu_custom_call.1}
  #allocation0 [shape = 'u32[]', space=smem, size = 0x4, offset = 0x4, fixed_abs, tag = 'smem constant byte address 0x4 - core index']
  #allocation1 [shape = 'u32[144,128]{1,0:T(1,128)}', space=vmem, size = 0x12000, scoped, tag = 'internal scratch']
  %s0 = inlined_call_operand.vmem [shape: s32[16,1], index: 0, kind: input, shape index: {}]
  %s1 = inlined_call_operand.hbm [shape: f32[512,128], index: 1, kind: input, shape index: {}]
  %s2 = inlined_call_operand.hbm [shape: f32[16,128], index: 2, kind: output, shape index: {}]
  %s3 = sld [smem:[#allocation0]]
  $region22: #{tpu_custom_call.1} parent=0
    _
  %s5 = ssub.s32 1, %s3
  %s6 = scalar_select 0, %s5, %s3
  $region1: #{tpu_custom_call.1} parent=0
    #allocation2 [shape = 'u8[262144]{0}', space=vmem, size = 0x40000, scoped, tag = 'input window, operand 1, single buffered']
    #allocation3 [shape = 's32[1]{0}', space=sflag, size = 0x4, scoped, tag = 'scoped memory for tpu_custom_call.1']
    #allocation4 [shape = 's32[1]{0}', space=sflag, size = 0x4, scoped, tag = 'scoped memory for tpu_custom_call.1']
    #allocation5 [shape = 'u8[8192]{0}', space=vmem, size = 0x2000, scoped, tag = 'output window, operand 0, single buffered']
    %7 = vsyncpa [#allocation3], 0
    %8 = vsyncpa [#allocation4], 0
    // Predicated region
    $region2: #{tpu_custom_call.1} parent=1 // pred_check
      _
    $region3: #{tpu_custom_call.1} parent=1 // pred_check_branch
      %10 = sbr.rel (0) target = $region5
    $region4: #{tpu_custom_call.1} parent=1 // pred_region
      _
    $region5: #{tpu_custom_call.1} parent=1 // pred_fallthru
      _
    // Predicated region
    $region6: #{tpu_custom_call.1} parent=1 // pred_check
      _
    $region7: #{tpu_custom_call.1} parent=1 // pred_check_branch
      %12 = sbr.rel (0) target = $region9
    $region8: #{tpu_custom_call.1} parent=1 // pred_region
      %s14 = ssub.s32 8192, 8192
      %15 = vsyncadd [#allocation3], %s14
      %s16 = sshll.u32 [#allocation2], 4
      %s17 = int_to_ptr.vmem [resolvable:$true] %s16
      %22 = dma.hbm_to_vmem [thread:$0]  %s1, 8192, %s17, [#allocation3], 128, 128, 8
    $region9: #{tpu_custom_call.1} parent=1 // pred_fallthru
      _
    // Predicated region
    $region10: #{tpu_custom_call.1} parent=1 // pred_check
      _
    $region11: #{tpu_custom_call.1} parent=1 // pred_check_branch
      %24 = sbr.rel (0) target = $region13
    $region12: #{tpu_custom_call.1} parent=1 // pred_region
      %25 = dma.done [#allocation3], 8192
    $region13: #{tpu_custom_call.1} parent=1 // pred_fallthru
      _
    %v26 = vld [vmem:[%s0] sm:$0xff]
    %v27 = vld [vmem:[%s0 + $0x8] sm:$0xff]
    %v28 = vlaneseq
    %v29 = vand.u32 %v28, 127
    %v30 = vadd.s32 %v29, 128
    %v31 = vadd.s32 %v29, 256
    %v32 = vadd.s32 %v29, 384
    %33 = vset.pattern.permute.xlu0 0
    %34 = vperm.xlu0 %33, %v26
    %v35 = vpop.permute.xlu0 %34
    %36 = vset.pattern.permute.xlu0 0
    %37 = vperm.xlu0 %36, %v27
    %v38 = vpop.permute.xlu0 %37
    %vm39 = vcmp.eq.s32.totalorder %v29, %v35
    %vm40 = vcmp.eq.s32.totalorder %v30, %v35
    %vm41 = vcmp.eq.s32.totalorder %v31, %v35
    %vm42 = vcmp.eq.s32.totalorder %v32, %v35
    %vm43 = vcmp.eq.s32.totalorder %v29, %v38
    %vm44 = vcmp.eq.s32.totalorder %v30, %v38
    %vm45 = vcmp.eq.s32.totalorder %v31, %v38
    %vm46 = vcmp.eq.s32.totalorder %v32, %v38
    %v47 = vsel %vm39, 1, 0
    %v48 = vsel %vm40, 1, 0
    %v49 = vsel %vm41, 1, 0
    %v50 = vsel %vm42, 1, 0
    %v51 = vsel %vm43, 1, 0
    %v52 = vsel %vm44, 1, 0
    %v53 = vsel %vm45, 1, 0
    %v54 = vsel %vm46, 1, 0
    %v55 = vcvt.s32.f32 %v47
    %v56 = vcvt.s32.f32 %v48
    %v57 = vcvt.s32.f32 %v49
    %v58 = vcvt.s32.f32 %v50
    %v59 = vcvt.s32.f32 %v51
    %v60 = vcvt.s32.f32 %v52
    %v61 = vcvt.s32.f32 %v53
    %v62 = vcvt.s32.f32 %v54
    %v63 = vld [vmem:[#allocation2] sm:$0xff]
    %v64 = vld [vmem:[#allocation2 + $0x8] sm:$0xff]
    %v65 = vld [vmem:[#allocation2 + $0x10] sm:$0xff]
    %v66 = vld [vmem:[#allocation2 + $0x18] sm:$0xff]
    %v67 = vld [vmem:[#allocation2 + $0x20] sm:$0xff]
    %v68 = vld [vmem:[#allocation2 + $0x28] sm:$0xff]
    %v69 = vld [vmem:[#allocation2 + $0x30] sm:$0xff]
    %v70 = vld [vmem:[#allocation2 + $0x38] sm:$0xff]
    %v71 = vld [vmem:[#allocation2 + $0x40] sm:$0xff]
    %v72 = vld [vmem:[#allocation2 + $0x48] sm:$0xff]
    %v73 = vld [vmem:[#allocation2 + $0x50] sm:$0xff]
    %v74 = vld [vmem:[#allocation2 + $0x58] sm:$0xff]
    %v75 = vld [vmem:[#allocation2 + $0x60] sm:$0xff]
    %v76 = vld [vmem:[#allocation2 + $0x68] sm:$0xff]
    %v77 = vld [vmem:[#allocation2 + $0x70] sm:$0xff]
    %v78 = vld [vmem:[#allocation2 + $0x78] sm:$0xff]
    %v79 = vld [vmem:[#allocation2 + $0x80] sm:$0xff]
    %v80 = vld [vmem:[#allocation2 + $0x88] sm:$0xff]
    %v81 = vld [vmem:[#allocation2 + $0x90] sm:$0xff]
    %v82 = vld [vmem:[#allocation2 + $0x98] sm:$0xff]
    %v83 = vld [vmem:[#allocation2 + $0xa0] sm:$0xff]
    %v84 = vld [vmem:[#allocation2 + $0xa8] sm:$0xff]
    %v85 = vld [vmem:[#allocation2 + $0xb0] sm:$0xff]
    %v86 = vld [vmem:[#allocation2 + $0xb8] sm:$0xff]
    %v87 = vld [vmem:[#allocation2 + $0xc0] sm:$0xff]
    %v88 = vld [vmem:[#allocation2 + $0xc8] sm:$0xff]
    %v89 = vld [vmem:[#allocation2 + $0xd0] sm:$0xff]
    %v90 = vld [vmem:[#allocation2 + $0xd8] sm:$0xff]
    %v91 = vld [vmem:[#allocation2 + $0xe0] sm:$0xff]
    %v92 = vld [vmem:[#allocation2 + $0xe8] sm:$0xff]
    %v93 = vld [vmem:[#allocation2 + $0xf0] sm:$0xff]
    %v94 = vld [vmem:[#allocation2 + $0xf8] sm:$0xff]
    %v95 = vld [vmem:[#allocation2 + $0x100] sm:$0xff]
    %v96 = vld [vmem:[#allocation2 + $0x108] sm:$0xff]
    %v97 = vld [vmem:[#allocation2 + $0x110] sm:$0xff]
    %v98 = vld [vmem:[#allocation2 + $0x118] sm:$0xff]
    %v99 = vld [vmem:[#allocation2 + $0x120] sm:$0xff]
    %v100 = vld [vmem:[#allocation2 + $0x128] sm:$0xff]
    %v101 = vld [vmem:[#allocation2 + $0x130] sm:$0xff]
    %v102 = vld [vmem:[#allocation2 + $0x138] sm:$0xff]
    %v103 = vld [vmem:[#allocation2 + $0x140] sm:$0xff]
    %v104 = vld [vmem:[#allocation2 + $0x148] sm:$0xff]
    %v105 = vld [vmem:[#allocation2 + $0x150] sm:$0xff]
    %v106 = vld [vmem:[#allocation2 + $0x158] sm:$0xff]
    %v107 = vld [vmem:[#allocation2 + $0x160] sm:$0xff]
    %v108 = vld [vmem:[#allocation2 + $0x168] sm:$0xff]
    %v109 = vld [vmem:[#allocation2 + $0x170] sm:$0xff]
    %v110 = vld [vmem:[#allocation2 + $0x178] sm:$0xff]
    %v111 = vld [vmem:[#allocation2 + $0x180] sm:$0xff]
    %v112 = vld [vmem:[#allocation2 + $0x188] sm:$0xff]
    %v113 = vld [vmem:[#allocation2 + $0x190] sm:$0xff]
    %v114 = vld [vmem:[#allocation2 + $0x198] sm:$0xff]
    %v115 = vld [vmem:[#allocation2 + $0x1a0] sm:$0xff]
    %v116 = vld [vmem:[#allocation2 + $0x1a8] sm:$0xff]
    %v117 = vld [vmem:[#allocation2 + $0x1b0] sm:$0xff]
    %v118 = vld [vmem:[#allocation2 + $0x1b8] sm:$0xff]
    %v119 = vld [vmem:[#allocation2 + $0x1c0] sm:$0xff]
    %v120 = vld [vmem:[#allocation2 + $0x1c8] sm:$0xff]
    %v121 = vld [vmem:[#allocation2 + $0x1d0] sm:$0xff]
    %v122 = vld [vmem:[#allocation2 + $0x1d8] sm:$0xff]
    %v123 = vld [vmem:[#allocation2 + $0x1e0] sm:$0xff]
    %v124 = vld [vmem:[#allocation2 + $0x1e8] sm:$0xff]
    %v125 = vld [vmem:[#allocation2 + $0x1f0] sm:$0xff]
    %v126 = vld [vmem:[#allocation2 + $0x1f8] sm:$0xff]
    %127 = vmatprep.subr.mxu0 0.0
    %128 = vmatpush1.msra.mxu0 %v78
    %129 = vmatprep.subr.mxu0 0.0
    %130 = vmatpush1.msra.mxu0 %v77
    %131 = vmatprep.subr.mxu0 0.0
    %132 = vmatpush1.msra.mxu0 %v76
    %133 = vmatprep.subr.mxu0 0.0
    %134 = vmatpush1.msra.mxu0 %v75
    %135 = vmatprep.subr.mxu0 0.0
    %136 = vmatpush1.msra.mxu0 %v74
    %137 = vmatprep.subr.mxu0 0.0
    %138 = vmatpush1.msra.mxu0 %v73
    %139 = vmatprep.subr.mxu0 0.0
    %140 = vmatpush1.msra.mxu0 %v72
    %141 = vmatprep.subr.mxu0 0.0
    %142 = vmatpush1.msra.mxu0 %v71
    %143 = vmatprep.subr.mxu0 0.0
    %144 = vmatpush1.msra.mxu0 %v70
    %145 = vmatprep.subr.mxu0 0.0
    %146 = vmatpush1.msra.mxu0 %v69
    %147 = vmatprep.subr.mxu0 0.0
    %148 = vmatpush1.msra.mxu0 %v68
    %149 = vmatprep.subr.mxu0 0.0
    %150 = vmatpush1.msra.mxu0 %v67
    %151 = vmatprep.subr.mxu0 0.0
    %152 = vmatpush1.msra.mxu0 %v66
    %153 = vmatprep.subr.mxu0 0.0
    %154 = vmatpush1.msra.mxu0 %v65
    %155 = vmatprep.subr.mxu0 0.0
    %156 = vmatpush1.msra.mxu0 %v64
    %157 = vmatprep.subr.mxu0 0.0
    %158 = vmatpush1.msra.mxu0 %v63
    %159 = vmatprep.subr.mxu0 0.0
    %160 = vmatpush2.msra.mxu0 %v94
    %161 = vmatprep.subr.mxu0 0.0
    %162 = vmatpush2.msra.mxu0 %v93
    %163 = vmatprep.subr.mxu0 0.0
    %164 = vmatpush2.msra.mxu0 %v92
    %165 = vmatprep.subr.mxu0 0.0
    %166 = vmatpush2.msra.mxu0 %v91
    %167 = vmatprep.subr.mxu0 0.0
    %168 = vmatpush2.msra.mxu0 %v90
    %169 = vmatprep.subr.mxu0 0.0
    %170 = vmatpush2.msra.mxu0 %v89
    %171 = vmatprep.subr.mxu0 0.0
    %172 = vmatpush2.msra.mxu0 %v88
    %173 = vmatprep.subr.mxu0 0.0
    %174 = vmatpush2.msra.mxu0 %v87
    %175 = vmatprep.subr.mxu0 0.0
    %176 = vmatpush2.msra.mxu0 %v86
    %177 = vmatprep.subr.mxu0 0.0
    %178 = vmatpush2.msra.mxu0 %v85
    %179 = vmatprep.subr.mxu0 0.0
    %180 = vmatpush2.msra.mxu0 %v84
    %181 = vmatprep.subr.mxu0 0.0
    %182 = vmatpush2.msra.mxu0 %v83
    %183 = vmatprep.subr.mxu0 0.0
    %184 = vmatpush2.msra.mxu0 %v82
    %185 = vmatprep.subr.mxu0 0.0
    %186 = vmatpush2.msra.mxu0 %v81
    %187 = vmatprep.subr.mxu0 0.0
    %188 = vmatpush2.msra.mxu0 %v80
    %189 = vmatprep.subr.mxu0 0.0
    %190 = vmatpush2.msra.mxu0 %v79
    %191 = vmatprep.mubr.f32.mxu0 %v56
    %192 = vmatmul.mubr.f32.gmra.mxu0 %v55
    %v193 = vpop.f32.mrf.mxu0
    %v194 = vadd.f32 0.0, %v193
    %v195 = vpop.f32.mrf.mxu0
    %196 = vmatprep.mubr.f32.mxu0 %v60
    %197 = vmatmul.mubr.f32.gmra.mxu0 %v59
    %v198 = vpop.f32.mrf.mxu0
    %v199 = vadd.f32 0.0, %v198
    %v200 = vpop.f32.mrf.mxu0
    %201 = vdwg.mxu0
    %202 = vmatprep.subr.mxu0 0.0
    %203 = vmatpush1.msra.mxu0 %v110
    %204 = vmatprep.subr.mxu0 0.0
    %205 = vmatpush1.msra.mxu0 %v109
    %206 = vmatprep.subr.mxu0 0.0
    %207 = vmatpush1.msra.mxu0 %v108
    %208 = vmatprep.subr.mxu0 0.0
    %209 = vmatpush1.msra.mxu0 %v107
    %210 = vmatprep.subr.mxu0 0.0
    %211 = vmatpush1.msra.mxu0 %v106
    %212 = vmatprep.subr.mxu0 0.0
    %213 = vmatpush1.msra.mxu0 %v105
    %214 = vmatprep.subr.mxu0 0.0
    %215 = vmatpush1.msra.mxu0 %v104
    %216 = vmatprep.subr.mxu0 0.0
    %217 = vmatpush1.msra.mxu0 %v103
    %218 = vmatprep.subr.mxu0 0.0
    %219 = vmatpush1.msra.mxu0 %v102
    %220 = vmatprep.subr.mxu0 0.0
    %221 = vmatpush1.msra.mxu0 %v101
    %222 = vmatprep.subr.mxu0 0.0
    %223 = vmatpush1.msra.mxu0 %v100
    %224 = vmatprep.subr.mxu0 0.0
    %225 = vmatpush1.msra.mxu0 %v99
    %226 = vmatprep.subr.mxu0 0.0
    %227 = vmatpush1.msra.mxu0 %v98
    %228 = vmatprep.subr.mxu0 0.0
    %229 = vmatpush1.msra.mxu0 %v97
    %230 = vmatprep.subr.mxu0 0.0
    %231 = vmatpush1.msra.mxu0 %v96
    %232 = vmatprep.subr.mxu0 0.0
    %233 = vmatpush1.msra.mxu0 %v95
    %234 = vmatprep.subr.mxu0 0.0
    %235 = vmatpush2.msra.mxu0 %v126
    %236 = vmatprep.subr.mxu0 0.0
    %237 = vmatpush2.msra.mxu0 %v125
    %238 = vmatprep.subr.mxu0 0.0
    %239 = vmatpush2.msra.mxu0 %v124
    %240 = vmatprep.subr.mxu0 0.0
    %241 = vmatpush2.msra.mxu0 %v123
    %242 = vmatprep.subr.mxu0 0.0
    %243 = vmatpush2.msra.mxu0 %v122
    %244 = vmatprep.subr.mxu0 0.0
    %245 = vmatpush2.msra.mxu0 %v121
    %246 = vmatprep.subr.mxu0 0.0
    %247 = vmatpush2.msra.mxu0 %v120
    %248 = vmatprep.subr.mxu0 0.0
    %249 = vmatpush2.msra.mxu0 %v119
    %250 = vmatprep.subr.mxu0 0.0
    %251 = vmatpush2.msra.mxu0 %v118
    %252 = vmatprep.subr.mxu0 0.0
    %253 = vmatpush2.msra.mxu0 %v117
    %254 = vmatprep.subr.mxu0 0.0
    %255 = vmatpush2.msra.mxu0 %v116
    %256 = vmatprep.subr.mxu0 0.0
    %257 = vmatpush2.msra.mxu0 %v115
    %258 = vmatprep.subr.mxu0 0.0
    %259 = vmatpush2.msra.mxu0 %v114
    %260 = vmatprep.subr.mxu0 0.0
    %261 = vmatpush2.msra.mxu0 %v113
    %262 = vmatprep.subr.mxu0 0.0
    %263 = vmatpush2.msra.mxu0 %v112
    %264 = vmatprep.subr.mxu0 0.0
    %265 = vmatpush2.msra.mxu0 %v111
    %266 = vmatprep.mubr.f32.mxu0 %v58
    %267 = vmatmul.mubr.f32.gmra.mxu0 %v57
    %v268 = vpop.f32.mrf.mxu0
    %v269 = vadd.f32 %v194, %v268
    %v270 = vpop.f32.mrf.mxu0
    %271 = vmatprep.mubr.f32.mxu0 %v62
    %272 = vmatmul.mubr.f32.gmra.mxu0 %v61
    %v273 = vpop.f32.mrf.mxu0
    %v274 = vadd.f32 %v199, %v273
    %v275 = vpop.f32.mrf.mxu0
    %276 = vdwg.mxu0
    %v277 = vmul.f32 %v269, 11.313708
    %v278 = vmul.f32 %v274, 11.313708
    %279 = vst [vmem:[#allocation5] sm:$0xff] %v277
    %280 = vst [vmem:[#allocation5 + $0x8] sm:$0xff] %v278
    // Predicated region
    $region14: #{tpu_custom_call.1} parent=1 // pred_check
      _
    $region15: #{tpu_custom_call.1} parent=1 // pred_check_branch
      %282 = sbr.rel (0) target = $region17
    $region16: #{tpu_custom_call.1} parent=1 // pred_region
      %s284 = ssub.s32 256, 256
      %285 = vsyncadd [#allocation4], %s284
      %s286 = sshll.u32 [#allocation5], 4
      %s287 = int_to_ptr.vmem [resolvable:$true] %s286
      %292 = dma.vmem_to_hbm [thread:$0]  %s287, 256, %s2, [#allocation4], 128, 128, 8
    $region17: #{tpu_custom_call.1} parent=1 // pred_fallthru
      _
    // Predicated region
    $region18: #{tpu_custom_call.1} parent=1 // pred_check
      _
    $region19: #{tpu_custom_call.1} parent=1 // pred_check_branch
      %294 = sbr.rel (0) target = $region21
    $region20: #{tpu_custom_call.1} parent=1 // pred_region
      %295 = dma.done [#allocation4], 256
    $region21: #{tpu_custom_call.1} parent=1 // pred_fallthru
      _
    %296 = vsyncpa [#allocation3], 1
    %297 = vsyncpa [#allocation4], 1

</llo_original>
